<compile_context>
chip_gen: v6e
topology: v6e:2x2x1
jax: 0.10.0
libtpu: 0.0.40
codegen_flags: <defaults>
</compile_context>

<pallas_src>
import functools

import jax
import jax.numpy as jnp
from jax.experimental import pallas as pl
from jax.experimental.pallas import tpu as pltpu

IGNORE_INDEX = 255
ALPHA = 0.5
GAMMA = 2.0


def _ce_sum_kernel(logit_ref, target_ref, ce_out_ref, cnt_out_ref,
                   ce_acc, cnt_acc, *, hw, bpo, need_mask):
    # logit_ref  : (C, SUB, L) float   -- pixels dense on (sublane, lane)
    # target_ref : (SUB, L)    int
    # ce_out_ref : (1, 1) f32          cnt_out_ref : (1, 1) f32
    # ce_acc     : (SUB, L) f32        cnt_acc     : (SUB, L) f32   (VMEM scratch)
    o = pl.program_id(1)
    j = pl.program_id(2)
    nj = pl.num_programs(2)

    @pl.when(j == 0)
    def _():
        ce_acc[...] = jnp.zeros_like(ce_acc)
        cnt_acc[...] = jnp.zeros_like(cnt_acc)

    x = logit_ref[...].astype(jnp.float32)           # (C, SUB, L)
    t = target_ref[...].astype(jnp.int32)            # (SUB, L)
    C, SUB, L = x.shape

    # log-sum-exp over the (small) leading class axis: dense VPU/EUP work.
    m = jnp.max(x, axis=0)                           # (SUB, L)
    sexp = jnp.sum(jnp.exp(x - m[None]), axis=0)     # (SUB, L)
    lse = m + jnp.log(sexp)                          # (SUB, L)

    # Gather the target-class logit with compare+select (no relayout copies).
    cid = jax.lax.broadcasted_iota(jnp.int32, x.shape, 0)
    picked = jnp.sum(jnp.where(cid == t[None], x, 0.0), axis=0)   # (SUB, L)

    valid = t != IGNORE_INDEX
    if need_mask:
        # Tail block overhangs the image: mask pixels past the real HW.
        sub_i = jax.lax.broadcasted_iota(jnp.int32, (SUB, L), 0)
        lane_i = jax.lax.broadcasted_iota(jnp.int32, (SUB, L), 1)
        row = (o * bpo + j) * SUB + sub_i
        valid = jnp.logical_and(valid, row * L + lane_i < hw)

    ce_acc[...] += jnp.where(valid, lse - picked, 0.0)
    cnt_acc[...] += valid.astype(jnp.float32)

    @pl.when(j == nj - 1)
    def _():
        ce_out_ref[...] = jnp.sum(ce_acc[...], keepdims=True)
        cnt_out_ref[...] = jnp.sum(cnt_acc[...], keepdims=True)


def _choose_sub(rows, n_classes, lane, itemsize,
                budget_bytes=2 << 20, sub_cap=512):
    """Sublane tile size: multiple of 8 within a VMEM byte budget, or the full
    row extent when the image is small (allowed by the block-shape rules)."""
    lane_pad = ((lane + 127) // 128) * 128
    per_row = max(1, n_classes * lane_pad * itemsize)
    sub = (budget_bytes // per_row) // 8 * 8
    sub = max(8, min(sub_cap, sub))
    return rows if rows <= sub else sub


def focal_loss(logit_nchw, target_nhw, alpha=ALPHA, gamma=GAMMA, outer=None):
    N, C, H, W = logit_nchw.shape
    HW = H * W

    if (not jnp.issubdtype(target_nhw.dtype, jnp.integer)
            or target_nhw.dtype == jnp.int64):
        target_nhw = target_nhw.astype(jnp.int32)

    # Pick a pixel layout that is a pure reshape (no transpose, no pad, no copy):
    #  * HW % 128 == 0 : (N, C, HW//128, 128) -- pixels fill sublanes AND lanes.
    #  * otherwise     : keep natural (N, C, H, W); W sits on the lane axis.
    if HW % 128 == 0:
        ROWS, L = HW // 128, 128
        logits = logit_nchw.reshape(N, C, ROWS, L)
        targets = target_nhw.reshape(N, ROWS, L)
    else:
        ROWS, L = H, W
        logits = logit_nchw
        targets = target_nhw

    SUB = _choose_sub(ROWS, C, L, logits.dtype.itemsize)
    NB = (ROWS + SUB - 1) // SUB                 # row-blocks per image

    # Extra "parallel" chunks so v7x's 2nd TensorCore has work when N is odd.
    if outer is None:
        outer = 2 if (N % 2 == 1 and NB % 2 == 0) else 1
    if NB % outer != 0:
        outer = 1
    BPO = NB // outer                            # row-blocks per (image, chunk)

    need_mask = (ROWS % SUB != 0)

    kernel = functools.partial(_ce_sum_kernel, hw=HW, bpo=BPO,
                               need_mask=need_mask)

    ce_part, cnt_part = pl.pallas_call(
        kernel,
        out_shape=(
            jax.ShapeDtypeStruct((N * outer, 1, 1), jnp.float32),
            jax.ShapeDtypeStruct((N * outer, 1, 1), jnp.float32),
        ),
        grid_spec=pltpu.PrefetchScalarGridSpec(
            num_scalar_prefetch=0,
            grid=(N, outer, BPO),
            in_specs=[
                pl.BlockSpec((pl.Squeezed(), C, SUB, L),
                             lambda n, o, j: (n, 0, o * BPO + j, 0)),
                pl.BlockSpec((pl.Squeezed(), SUB, L),
                             lambda n, o, j: (n, o * BPO + j, 0)),
            ],
            out_specs=[
                pl.BlockSpec((pl.Squeezed(), 1, 1),
                             lambda n, o, j: (n * outer + o, 0, 0)),
                pl.BlockSpec((pl.Squeezed(), 1, 1),
                             lambda n, o, j: (n * outer + o, 0, 0)),
            ],
            scratch_shapes=[
                pltpu.VMEM((SUB, L), jnp.float32),
                pltpu.VMEM((SUB, L), jnp.float32),
            ],
        ),
        compiler_params=pltpu.CompilerParams(
            dimension_semantics=("parallel", "parallel", "arbitrary")),
    )(logits, targets)

    # Combine partials; mean CE over non-ignored pixels, then focal transform.
    ce = jnp.sum(ce_part) / jnp.sum(cnt_part)
    logpt = -ce
    pt = jnp.exp(logpt)
    return -((1.0 - pt) ** gamma) * alpha * logpt


def _reference_focal_loss(logit_nchw, target_nhw, alpha=ALPHA, gamma=GAMMA):
    N, C, H, W = logit_nchw.shape
    x = jnp.transpose(logit_nchw, (0, 2, 3, 1)).reshape(-1, C).astype(jnp.float32)
    t = target_nhw.astype(jnp.int32).reshape(-1)
    lse = jax.nn.logsumexp(x, axis=-1)
    picked = jnp.take_along_axis(
        x, jnp.clip(t, 0, C - 1)[:, None], axis=-1)[:, 0]
    valid = (t != IGNORE_INDEX)
    ce = jnp.sum(jnp.where(valid, lse - picked, 0.0)) / jnp.sum(valid)
    logpt = -ce
    pt = jnp.exp(logpt)
    return -((1.0 - pt) ** gamma) * alpha * logpt


if __name__ == "__main__":
    key = jax.random.PRNGKey(0)
    k1, k2, k3 = jax.random.split(key, 3)

    N, C, H, W = 2, 4, 16, 16
    logit = jax.random.normal(k1, (N, C, H, W), dtype=jnp.float32)
    target = jax.random.randint(k2, (N, H, W), 0, C, dtype=jnp.int32)
    # sprinkle in some ignored pixels (ignore_index = 255)
    ignore_mask = jax.random.bernoulli(k3, 0.1, (N, H, W))
    target = jnp.where(ignore_mask, IGNORE_INDEX, target)

    loss = jax.block_until_ready(focal_loss(logit, target))
    ref = _reference_focal_loss(logit, target)
    assert jnp.allclose(loss, ref, rtol=1e-5, atol=1e-5), (loss, ref)
    print("KERNEL_OK")
</pallas_src>

<mosaic_0001>
module attributes {stable_mosaic.version = 11 : i64} {
  func.func @_ce_sum_kernel(%arg0: i32, %arg1: i32, %arg2: i32, %arg3: memref<1x4x2x128xf32, #tpu.memory_space<vmem>>, %arg4: memref<1x2x128xi32, #tpu.memory_space<vmem>>, %arg5: memref<1x1x1xf32, #tpu.memory_space<vmem>>, %arg6: memref<1x1x1xf32, #tpu.memory_space<vmem>>, %arg7: memref<2x128xf32, #tpu.memory_space<vmem>>, %arg8: memref<2x128xf32, #tpu.memory_space<vmem>>) attributes {dimension_semantics = [#tpu.dimension_semantics<parallel>, #tpu.dimension_semantics<parallel>, #tpu.dimension_semantics<arbitrary>], iteration_bounds = array<i64: 2, 1, 1>, scalar_prefetch = 0 : i64, scratch_operands = 2 : i64, tpu.core_type = #tpu.core_type<tc>, window_params = [{transform_indices = @transform_0, window_bounds = array<i64: 1, 4, 2, 128>}, {transform_indices = @transform_1, window_bounds = array<i64: 1, 2, 128>}, {transform_indices = @transform_2, window_bounds = array<i64: 1, 1, 1>}, {transform_indices = @transform_3, window_bounds = array<i64: 1, 1, 1>}]} {
    %c0_i32 = arith.constant 0 : i32
    %0 = arith.cmpi eq, %arg2, %c0_i32 : i32
    %1 = arith.extui %0 : i1 to i32
    %c0_i32_0 = arith.constant 0 : i32
    %2 = arith.cmpi ne, %1, %c0_i32_0 : i32
    scf.if %2 {
      %cst_21 = arith.constant 0.000000e+00 : f32
      %38 = vector.broadcast %cst_21 : f32 to vector<2x128xf32>
      %c0_22 = arith.constant 0 : index
      %c0_23 = arith.constant 0 : index
      %39 = vector.load %arg7[%c0_22, %c0_23] : memref<2x128xf32, #tpu.memory_space<vmem>>, vector<2x128xf32>
      tpu.vector_store %arg7[%c0_22, %c0_23], %38 {strides = array<i32>} : memref<2x128xf32, #tpu.memory_space<vmem>>, vector<2x128xf32>,
      %cst_24 = arith.constant 0.000000e+00 : f32
      %40 = vector.broadcast %cst_24 : f32 to vector<2x128xf32>
      %c0_25 = arith.constant 0 : index
      %c0_26 = arith.constant 0 : index
      %41 = vector.load %arg8[%c0_25, %c0_26] : memref<2x128xf32, #tpu.memory_space<vmem>>, vector<2x128xf32>
      tpu.vector_store %arg8[%c0_25, %c0_26], %40 {strides = array<i32>} : memref<2x128xf32, #tpu.memory_space<vmem>>, vector<2x128xf32>,
    } else {
    }
    %c0 = arith.constant 0 : index
    %c0_1 = arith.constant 0 : index
    %c0_2 = arith.constant 0 : index
    %c0_3 = arith.constant 0 : index
    %3 = vector.load %arg3[%c0, %c0_1, %c0_2, %c0_3] : memref<1x4x2x128xf32, #tpu.memory_space<vmem>>, vector<1x4x2x128xf32>
    %4 = vector.shape_cast %3 : vector<1x4x2x128xf32> to vector<4x2x128xf32>
    %c0_4 = arith.constant 0 : index
    %c0_5 = arith.constant 0 : index
    %c0_6 = arith.constant 0 : index
    %5 = vector.load %arg4[%c0_4, %c0_5, %c0_6] : memref<1x2x128xi32, #tpu.memory_space<vmem>>, vector<1x2x128xi32>
    %6 = vector.shape_cast %5 : vector<1x2x128xi32> to vector<2x128xi32>
    %cst = arith.constant dense<0xFF800000> : vector<2x128xf32>
    %7 = vector.multi_reduction <maximumf>, %4, %cst [0] : vector<4x2x128xf32> to vector<2x128xf32>
    %8 = vector.shape_cast %7 : vector<2x128xf32> to vector<1x2x128xf32>
    %9 = vector.broadcast %8 : vector<1x2x128xf32> to vector<4x2x128xf32>
    %10 = arith.subf %4, %9 : vector<4x2x128xf32>
    %11 = math.exp %10 : vector<4x2x128xf32>
    %cst_7 = arith.constant dense<0.000000e+00> : vector<2x128xf32>
    %12 = vector.multi_reduction <add>, %11, %cst_7 [0] : vector<4x2x128xf32> to vector<2x128xf32>
    %13 = math.log %12 : vector<2x128xf32>
    %14 = arith.addf %7, %13 : vector<2x128xf32>
    %15 = tpu.iota {dimensions = array<i32: 0>} : vector<4x2x128xi32>
    %16 = vector.shape_cast %6 : vector<2x128xi32> to vector<1x2x128xi32>
    %17 = vector.broadcast %16 : vector<1x2x128xi32> to vector<4x2x128xi32>
    %18 = arith.cmpi eq, %15, %17 : vector<4x2x128xi32>
    %cst_8 = arith.constant 0.000000e+00 : f32
    %19 = vector.broadcast %cst_8 : f32 to vector<4x2x128xf32>
    %20 = arith.select %18, %4, %19 : vector<4x2x128xi1>, vector<4x2x128xf32>
    %cst_9 = arith.constant dense<0.000000e+00> : vector<2x128xf32>
    %21 = vector.multi_reduction <add>, %20, %cst_9 [0] : vector<4x2x128xf32> to vector<2x128xf32>
    %c255_i32 = arith.constant 255 : i32
    %22 = vector.broadcast %c255_i32 : i32 to vector<2x128xi32>
    %23 = arith.cmpi ne, %6, %22 : vector<2x128xi32>
    %c0_10 = arith.constant 0 : index
    %c0_11 = arith.constant 0 : index
    %24 = vector.load %arg7[%c0_10, %c0_11] : memref<2x128xf32, #tpu.memory_space<vmem>>, vector<2x128xf32>
    %25 = arith.subf %14, %21 : vector<2x128xf32>
    %cst_12 = arith.constant 0.000000e+00 : f32
    %26 = vector.broadcast %cst_12 : f32 to vector<2x128xf32>
    %27 = arith.select %23, %25, %26 : vector<2x128xi1>, vector<2x128xf32>
    %28 = arith.addf %24, %27 : vector<2x128xf32>
    %c0_13 = arith.constant 0 : index
    %c0_14 = arith.constant 0 : index
    %29 = vector.load %arg7[%c0_13, %c0_14] : memref<2x128xf32, #tpu.memory_space<vmem>>, vector<2x128xf32>
    tpu.vector_store %arg7[%c0_13, %c0_14], %28 {strides = array<i32>} : memref<2x128xf32, #tpu.memory_space<vmem>>, vector<2x128xf32>,
    %c0_15 = arith.constant 0 : index
    %c0_16 = arith.constant 0 : index
    %30 = vector.load %arg8[%c0_15, %c0_16] : memref<2x128xf32, #tpu.memory_space<vmem>>, vector<2x128xf32>
    %31 = arith.extui %23 : vector<2x128xi1> to vector<2x128xi32>
    %32 = arith.sitofp %31 : vector<2x128xi32> to vector<2x128xf32>
    %33 = arith.addf %30, %32 : vector<2x128xf32>
    %c0_17 = arith.constant 0 : index
    %c0_18 = arith.constant 0 : index
    %34 = vector.load %arg8[%c0_17, %c0_18] : memref<2x128xf32, #tpu.memory_space<vmem>>, vector<2x128xf32>
    tpu.vector_store %arg8[%c0_17, %c0_18], %33 {strides = array<i32>} : memref<2x128xf32, #tpu.memory_space<vmem>>, vector<2x128xf32>,
    %c0_i32_19 = arith.constant 0 : i32
    %35 = arith.cmpi eq, %arg2, %c0_i32_19 : i32
    %36 = arith.extui %35 : i1 to i32
    %c0_i32_20 = arith.constant 0 : i32
    %37 = arith.cmpi ne, %36, %c0_i32_20 : i32
    scf.if %37 {
      %c0_21 = arith.constant 0 : index
      %c0_22 = arith.constant 0 : index
      %38 = vector.load %arg7[%c0_21, %c0_22] : memref<2x128xf32, #tpu.memory_space<vmem>>, vector<2x128xf32>
      %39 = vector.shape_cast %38 : vector<2x128xf32> to vector<1x2x128xf32>
      %cst_23 = arith.constant dense<0.000000e+00> : vector<1xf32>
      %40 = vector.multi_reduction <add>, %39, %cst_23 [1, 2] : vector<1x2x128xf32> to vector<1xf32>
      %41 = vector.shape_cast %40 : vector<1xf32> to vector<1x1x1xf32>
      %42 = vector.extract %41[0, 0, 0] : f32 from vector<1x1x1xf32>
      %43 = vector.broadcast %42 : f32 to vector<1x1xf32>
      %c0_24 = arith.constant 0 : index
      %c0_25 = arith.constant 0 : index
      %c0_26 = arith.constant 0 : index
      %44 = vector.load %arg5[%c0_24, %c0_25, %c0_26] : memref<1x1x1xf32, #tpu.memory_space<vmem>>, vector<1x1x1xf32>
      %45 = vector.shape_cast %44 : vector<1x1x1xf32> to vector<1x1xf32>
      %46 = vector.shape_cast %43 : vector<1x1xf32> to vector<1x1x1xf32>
      tpu.vector_store %arg5[%c0_24, %c0_25, %c0_26], %46 {strides = array<i32>} : memref<1x1x1xf32, #tpu.memory_space<vmem>>, vector<1x1x1xf32>,
      %c0_27 = arith.constant 0 : index
      %c0_28 = arith.constant 0 : index
      %47 = vector.load %arg8[%c0_27, %c0_28] : memref<2x128xf32, #tpu.memory_space<vmem>>, vector<2x128xf32>
      %48 = vector.shape_cast %47 : vector<2x128xf32> to vector<1x2x128xf32>
      %cst_29 = arith.constant dense<0.000000e+00> : vector<1xf32>
      %49 = vector.multi_reduction <add>, %48, %cst_29 [1, 2] : vector<1x2x128xf32> to vector<1xf32>
      %50 = vector.shape_cast %49 : vector<1xf32> to vector<1x1x1xf32>
      %51 = vector.extract %50[0, 0, 0] : f32 from vector<1x1x1xf32>
      %52 = vector.broadcast %51 : f32 to vector<1x1xf32>
      %c0_30 = arith.constant 0 : index
      %c0_31 = arith.constant 0 : index
      %c0_32 = arith.constant 0 : index
      %53 = vector.load %arg6[%c0_30, %c0_31, %c0_32] : memref<1x1x1xf32, #tpu.memory_space<vmem>>, vector<1x1x1xf32>
      %54 = vector.shape_cast %53 : vector<1x1x1xf32> to vector<1x1xf32>
      %55 = vector.shape_cast %52 : vector<1x1xf32> to vector<1x1x1xf32>
      tpu.vector_store %arg6[%c0_30, %c0_31, %c0_32], %55 {strides = array<i32>} : memref<1x1x1xf32, #tpu.memory_space<vmem>>, vector<1x1x1xf32>,
    } else {
    }
    return
  }
  func.func @transform_0(%arg0: i32, %arg1: i32, %arg2: i32) -> (i32, i32, i32, i32) {
    %c1_i32 = arith.constant 1 : i32
    %0 = arith.muli %arg1, %c1_i32 : i32
    %1 = arith.addi %0, %arg2 : i32
    %c0_i32 = arith.constant 0 : i32
    %c0_i32_0 = arith.constant 0 : i32
    %c0_i32_1 = arith.constant 0 : i32
    return %arg0, %c0_i32, %1, %c0_i32_0 : i32, i32, i32, i32
  }
  func.func @transform_1(%arg0: i32, %arg1: i32, %arg2: i32) -> (i32, i32, i32) {
    %c1_i32 = arith.constant 1 : i32
    %0 = arith.muli %arg1, %c1_i32 : i32
    %1 = arith.addi %0, %arg2 : i32
    %c0_i32 = arith.constant 0 : i32
    %c0_i32_0 = arith.constant 0 : i32
    return %arg0, %1, %c0_i32 : i32, i32, i32
  }
  func.func @transform_2(%arg0: i32, %arg1: i32, %arg2: i32) -> (i32, i32, i32) {
    %c1_i32 = arith.constant 1 : i32
    %0 = arith.muli %arg0, %c1_i32 : i32
    %1 = arith.addi %0, %arg1 : i32
    %c0_i32 = arith.constant 0 : i32
    %c0_i32_0 = arith.constant 0 : i32
    %c0_i32_1 = arith.constant 0 : i32
    return %1, %c0_i32, %c0_i32_0 : i32, i32, i32
  }
  func.func @transform_3(%arg0: i32, %arg1: i32, %arg2: i32) -> (i32, i32, i32) {
    %c1_i32 = arith.constant 1 : i32
    %0 = arith.muli %arg0, %c1_i32 : i32
    %1 = arith.addi %0, %arg1 : i32
    %c0_i32 = arith.constant 0 : i32
    %c0_i32_0 = arith.constant 0 : i32
    %c0_i32_1 = arith.constant 0 : i32
    return %1, %c0_i32, %c0_i32_0 : i32, i32, i32
  }
}

</mosaic_0001>

<llo_original>
// kernel: tpu_custom_call.1
$region0: #{tpu_custom_call.1}
  #allocation0 [shape = 'u32[]', space=smem, size = 0x4, offset = 0x4, fixed_abs, tag = 'smem constant byte address 0x4 - core index']
  #allocation1 [shape = 'u32[144,128]{1,0:T(1,128)}', space=vmem, size = 0x12000, scoped, tag = 'internal scratch']
  #allocation2 [shape = 'f32[2,128]{1,0:T(2,128)}', space=vmem, size = 0x400, scoped, tag = 'scratch operand']
  #allocation3 [shape = 'f32[2,128]{1,0:T(2,128)}', space=vmem, size = 0x400, scoped, tag = 'scratch operand']
  %s0 = inlined_call_operand.hbm [shape: f32[2,4,2,128], index: 0, kind: input, shape index: {}]
  %s1 = inlined_call_operand.hbm [shape: s32[2,2,128], index: 1, kind: input, shape index: {}]
  %s2 = inlined_call_operand.vmem [shape: f32[2,1,1], index: 2, kind: output, shape index: {0}]
  %s3 = inlined_call_operand.vmem [shape: f32[2,1,1], index: 3, kind: output, shape index: {1}]
  %4 = xla_tuple %s2, %s3
  %s5 = sld [smem:[#allocation0]]
  $region65: #{tpu_custom_call.1} parent=0
    _
  %s7 = ssub.s32 1, %s5
  %s8 = scalar_select 0, %s7, %s5
  $region1: #{tpu_custom_call.1} parent=0
    #allocation4 [shape = 'u8[8192]{0}', space=vmem, size = 0x2000, scoped, tag = 'input window, operand 0']
    #allocation5 [shape = 's32[2]{0}', space=sflag, size = 0x8, scoped, tag = 'scoped memory for tpu_custom_call.1']
    #allocation6 [shape = 'u8[2048]{0}', space=vmem, size = 0x800, scoped, tag = 'input window, operand 1']
    #allocation7 [shape = 's32[2]{0}', space=sflag, size = 0x8, scoped, tag = 'scoped memory for tpu_custom_call.1']
    %9 = vsyncpa [#allocation5], 0
    %s10 = scalar_lea.sflag [#allocation5], 1
    %11 = vsyncpa %s10, 0
    %12 = vsyncpa [#allocation7], 0
    %s13 = scalar_lea.sflag [#allocation7], 1
    %14 = vsyncpa %s13, 0
    loop: start=0, step=1, limit=4
    $region2: #{tpu_custom_call.1} parent=1 // loop_pre_header
      _
    $region3: #{tpu_custom_call.1} parent=1 // loop_header
      %s16 = sphi 0, %s20
      %p17 = scmp.ge.s32.totalorder %s16, 4
      %s23 = sphi 0, %s42
      %s24 = sphi 0, %s38
      %s25 = sphi 0, %s34
      %s26 = sphi 0, %s23
      %s27 = sphi 0, %s24
      %s28 = sphi 0, %s25
      %s29 = sphi 0, %s26
      %s30 = sphi 0, %s27
      %s31 = sphi 0, %s28
      %s49 = sphi 0, %s51
      %s52 = sphi 0, %s49
      %s53 = sphi 0, %s52
      %s69 = sphi 0, %s53
      %s79 = sphi 0, %s81
      %s82 = sphi 0, %s79
      %s83 = sphi 0, %s82
      %s99 = sphi 0, %s83
      %s107 = sphi 0, %s109
      %s110 = sphi 0, %s107
      %s111 = sphi 0, %s110
      %s127 = sphi 0, %s111
      %s135 = sphi 0, %s137
      %s138 = sphi 0, %s135
      %s139 = sphi 0, %s138
      %s155 = sphi 0, %s139
    $region4: #{tpu_custom_call.1} parent=1 // loop_header_branch
      %19 = sbr.rel (%p17) target = $region8
    $region5: #{tpu_custom_call.1} parent=1 // loop_body
      %s21 = ssub.s32 %s16, 1
      %s22 = ssub.s32 %s16, 2
      %s32 = sadd.s32 1, %s25
      %p33 = scmp.ge.s32.totalorder %s32, 1
      %s34 = scalar_select %p33, 0, %s32
      %s35 = sadd.s32 1, %s24
      %s36 = scalar_select %p33, %s35, %s24
      %p37 = scmp.ge.s32.totalorder %s36, 1
      %s38 = scalar_select %p37, 0, %s36
      %s39 = sadd.s32 1, %s23
      %s40 = scalar_select %p37, %s39, %s23
      %p41 = scmp.ge.s32.totalorder %s40, 2
      %s42 = scalar_select %p41, 0, %s40
      %s43 = sadd.s32 %s24, %s25
      %s44 = sadd.s32 %s38, %s34
      %s45 = ssub.s32 %s23, %s42
      %s46 = ssub.s32 %s43, %s44
      %s47 = sor.u32 %s45, %s46
      %p48 = scmp.eq.s32.totalorder %s47, 0
      %s50 = sadd.s32 %s49, 1
      %s51 = scalar_select %p48, %s49, %s50
      %p54 = pneg %p48
      %p55 = scmp.eq.s32.totalorder %s16, 1
      %p56 = por %p54, %p55
      %p57 = scmp.ne.s32.totalorder %s49, %s52
      %p58 = scmp.eq.s32.totalorder %s16, 0
      %p59 = por %p57, %p58
      %p60 = scmp.ne.s32.totalorder %s49, %s52
      %p61 = scmp.eq.s32.totalorder %s21, 1
      %p62 = por %p60, %p61
      %p63 = scmp.ne.s32.totalorder %s52, %s53
      %p64 = scmp.eq.s32.totalorder %s21, 0
      %p65 = por %p63, %p64
      %p66 = scmp.ne.s32.totalorder %s52, %s53
      %p67 = scmp.eq.s32.totalorder %s22, 1
      %p68 = por %p66, %p67
      %p70 = scmp.ne.s32.totalorder %s53, %s69
      %p71 = scmp.eq.s32.totalorder %s22, 0
      %p72 = por %p70, %p71
      %s73 = sadd.s32 %s24, %s25
      %s74 = sadd.s32 %s38, %s34
      %s75 = ssub.s32 %s23, %s42
      %s76 = ssub.s32 %s73, %s74
      %s77 = sor.u32 %s75, %s76
      %p78 = scmp.eq.s32.totalorder %s77, 0
      %s80 = sadd.s32 %s79, 1
      %s81 = scalar_select %p78, %s79, %s80
      %p84 = pneg %p78
      %p85 = scmp.eq.s32.totalorder %s16, 1
      %p86 = por %p84, %p85
      %p87 = scmp.ne.s32.totalorder %s79, %s82
      %p88 = scmp.eq.s32.totalorder %s16, 0
      %p89 = por %p87, %p88
      %p90 = scmp.ne.s32.totalorder %s79, %s82
      %p91 = scmp.eq.s32.totalorder %s21, 1
      %p92 = por %p90, %p91
      %p93 = scmp.ne.s32.totalorder %s82, %s83
      %p94 = scmp.eq.s32.totalorder %s21, 0
      %p95 = por %p93, %p94
      %p96 = scmp.ne.s32.totalorder %s82, %s83
      %p97 = scmp.eq.s32.totalorder %s22, 1
      %p98 = por %p96, %p97
      %p100 = scmp.ne.s32.totalorder %s83, %s99
      %p101 = scmp.eq.s32.totalorder %s22, 0
      %p102 = por %p100, %p101
      %s103 = sadd.s32 %s23, %s24
      %s104 = sadd.s32 %s42, %s38
      %s105 = ssub.s32 %s103, %s104
      %p106 = scmp.eq.s32.totalorder %s105, 0
      %s108 = sadd.s32 %s107, 1
      %s109 = scalar_select %p106, %s107, %s108
      %p112 = pneg %p106
      %p113 = scmp.eq.s32.totalorder %s16, 1
      %p114 = por %p112, %p113
      %p115 = scmp.ne.s32.totalorder %s107, %s110
      %p116 = scmp.eq.s32.totalorder %s16, 0
      %p117 = por %p115, %p116
      %p118 = scmp.ne.s32.totalorder %s107, %s110
      %p119 = scmp.eq.s32.totalorder %s21, 1
      %p120 = por %p118, %p119
      %p121 = scmp.ne.s32.totalorder %s110, %s111
      %p122 = scmp.eq.s32.totalorder %s21, 0
      %p123 = por %p121, %p122
      %p124 = scmp.ne.s32.totalorder %s110, %s111
      %p125 = scmp.eq.s32.totalorder %s22, 1
      %p126 = por %p124, %p125
      %p128 = scmp.ne.s32.totalorder %s111, %s127
      %p129 = scmp.eq.s32.totalorder %s22, 0
      %p130 = por %p128, %p129
      %s131 = sadd.s32 %s23, %s24
      %s132 = sadd.s32 %s42, %s38
      %s133 = ssub.s32 %s131, %s132
      %p134 = scmp.eq.s32.totalorder %s133, 0
      %s136 = sadd.s32 %s135, 1
      %s137 = scalar_select %p134, %s135, %s136
      %p140 = pneg %p134
      %p141 = scmp.eq.s32.totalorder %s16, 1
      %p142 = por %p140, %p141
      %p143 = scmp.ne.s32.totalorder %s135, %s138
      %p144 = scmp.eq.s32.totalorder %s16, 0
      %p145 = por %p143, %p144
      %p146 = scmp.ne.s32.totalorder %s135, %s138
      %p147 = scmp.eq.s32.totalorder %s21, 1
      %p148 = por %p146, %p147
      %p149 = scmp.ne.s32.totalorder %s138, %s139
      %p150 = scmp.eq.s32.totalorder %s21, 0
      %p151 = por %p149, %p150
      %p152 = scmp.ne.s32.totalorder %s138, %s139
      %p153 = scmp.eq.s32.totalorder %s22, 1
      %p154 = por %p152, %p153
      %p156 = scmp.ne.s32.totalorder %s139, %s155
      %p157 = scmp.eq.s32.totalorder %s22, 0
      %p158 = por %p156, %p157
      %p159 = scmp.le.s32.totalorder 1, %s16
      %p160 = scmp.lt.s32.totalorder %s16, 3
      %p161 = pnand %p159, %p160
      %p162 = pneg %p161
      // Predicated region
      $region9: #{tpu_custom_call.1} parent=5 // pred_check
        _
      $region10: #{tpu_custom_call.1} parent=5 // pred_check_branch
        %164 = sbr.rel (%p161) target = $region12
      $region11: #{tpu_custom_call.1} parent=5 // pred_region
        %s165 = ssub.s32 %s16, 1
      $region12: #{tpu_custom_call.1} parent=5 // pred_fallthru
        _
      %p166 = scmp.lt.s32.totalorder %s16, 2
      // Predicated region
      $region13: #{tpu_custom_call.1} parent=5 // pred_check
        %p167 = pneg %p166
      $region14: #{tpu_custom_call.1} parent=5 // pred_check_branch
        %169 = sbr.rel (%p167) target = $region16
      $region15: #{tpu_custom_call.1} parent=5 // pred_region
        // Predicated region
        $region17: #{tpu_custom_call.1} parent=15 // pred_check
          %p170 = pneg %p59
        $region18: #{tpu_custom_call.1} parent=15 // pred_check_branch
          %172 = sbr.rel (%p170) target = $region20
        $region19: #{tpu_custom_call.1} parent=15 // pred_region
          %s173 = sand.u32 %s49, 1
          %s174 = scalar_lea.sflag [#allocation5], %s173
          %s175 = sand.u32 %s49, 1
          %s176 = smul.addr %s175, 8
          %s177 = scalar_lea.vmem [#allocation4], %s176
          %s178 = sadd.s32 %s24, %s25
          %s180 = ssub.s32 128, 128
          %181 = vsyncadd %s174, %s180
          %s182 = smul.addr %s23, 4
          %s183 = sadd.s32 %s178, %s182
          %s184 = smul.addr %s183, 32
          %s185 = scalar_lea.hbm %s0, %s184
          %s186 = sshll.u32 %s177, 4
          %s187 = int_to_ptr.vmem [resolvable:$true] %s186
          %192 = dma.hbm_to_vmem [thread:$0]  %s185, 128, %s187, %s174, 32, 32, 2
        $region20: #{tpu_custom_call.1} parent=15 // pred_fallthru
          _
        // Predicated region
        $region21: #{tpu_custom_call.1} parent=15 // pred_check
          %p193 = pneg %p89
        $region22: #{tpu_custom_call.1} parent=15 // pred_check_branch
          %195 = sbr.rel (%p193) target = $region24
        $region23: #{tpu_custom_call.1} parent=15 // pred_region
          %s196 = sand.u32 %s79, 1
          %s197 = scalar_lea.sflag [#allocation7], %s196
          %s198 = sand.u32 %s79, 1
          %s199 = smul.addr %s198, 2
          %s200 = scalar_lea.vmem [#allocation6], %s199
          %s201 = sadd.s32 %s24, %s25
          %s203 = ssub.s32 32, 32
          %204 = vsyncadd %s197, %s203
          %s205 = sadd.s32 %s201, %s23
          %s206 = smul.addr %s205, 32
          %s207 = scalar_lea.hbm %s1, %s206
          %s209 = sshll.u32 %s200, 4
          %s210 = int_to_ptr.vmem [resolvable:$true] %s209
          %212 = dma.hbm_to_vmem [thread:$0]  %s207, 32, %s210, %s197
        $region24: #{tpu_custom_call.1} parent=15 // pred_fallthru
          _
      $region16: #{tpu_custom_call.1} parent=5 // pred_fallthru
        _
      %p213 = scmp.le.s32.totalorder 1, %s16
      %p214 = scmp.lt.s32.totalorder %s16, 3
      %p215 = pnand %p213, %p214
      %p216 = pneg %p215
      // Predicated region
      $region25: #{tpu_custom_call.1} parent=5 // pred_check
        _
      $region26: #{tpu_custom_call.1} parent=5 // pred_check_branch
        %218 = sbr.rel (%p215) target = $region28
      $region27: #{tpu_custom_call.1} parent=5 // pred_region
        %s219 = ssub.s32 %s16, 1
        %s220 = sand.u32 %s52, 1
        %s221 = scalar_lea.sflag [#allocation5], %s220
        %s222 = sand.u32 %s52, 1
        %s223 = smul.addr %s222, 8
        %s224 = scalar_lea.vmem [#allocation4], %s223
        // Predicated region
        $region29: #{tpu_custom_call.1} parent=27 // pred_check
          %p225 = pneg %p65
        $region30: #{tpu_custom_call.1} parent=27 // pred_check_branch
          %227 = sbr.rel (%p225) target = $region32
        $region31: #{tpu_custom_call.1} parent=27 // pred_region
          %228 = dma.done %s221, 128
        $region32: #{tpu_custom_call.1} parent=27 // pred_fallthru
          _
        %s229 = sand.u32 %s82, 1
        %s230 = scalar_lea.sflag [#allocation7], %s229
        %s231 = sand.u32 %s82, 1
        %s232 = smul.addr %s231, 2
        %s233 = scalar_lea.vmem [#allocation6], %s232
        // Predicated region
        $region33: #{tpu_custom_call.1} parent=27 // pred_check
          %p234 = pneg %p95
        $region34: #{tpu_custom_call.1} parent=27 // pred_check_branch
          %236 = sbr.rel (%p234) target = $region36
        $region35: #{tpu_custom_call.1} parent=27 // pred_region
          %237 = dma.done %s230, 32
        $region36: #{tpu_custom_call.1} parent=27 // pred_fallthru
          _
        %s238 = sand.u32 %s52, 1
        %s239 = scalar_lea.sflag [#allocation5], %s238
        %s240 = sand.u32 %s52, 1
        %s241 = smul.addr %s240, 8
        %s242 = scalar_lea.vmem [#allocation4], %s241
        %p243 = pneg %p65
        %p244 = pneg %p62
        %s245 = sand.u32 %s82, 1
        %s246 = scalar_lea.sflag [#allocation7], %s245
        %s247 = sand.u32 %s82, 1
        %s248 = smul.addr %s247, 2
        %s249 = scalar_lea.vmem [#allocation6], %s248
        %p250 = pneg %p95
        %p251 = pneg %p92
        %p252 = pneg %p123
        %p253 = pneg %p120
        %s254 = sadd.s32 %s26, %s27
        %p255 = scmp.lt.s32.totalorder %s254, 1
        %s256 = scalar_select %p255, %s254, 1
        %s257 = scalar_lea.vmem %s2, %s256
        %p258 = pneg %p151
        %p259 = pneg %p148
        %s260 = sadd.s32 %s26, %s27
        %p261 = scmp.lt.s32.totalorder %s260, 1
        %s262 = scalar_select %p261, %s260, 1
        %s263 = scalar_lea.vmem %s3, %s262
        %s264 = sadd.s32 %s27, %s28
        %s265 = sadd.s32 %s27, %s28
        %s266 = sadd.s32 %s26, %s27
        %p267 = scmp.lt.s32.totalorder %s266, 1
        %s268 = scalar_select %p267, %s266, 1
        %s269 = scalar_lea.vmem %s2, %s268
        %s270 = sadd.s32 %s26, %s27
        %s271 = sadd.s32 %s26, %s27
        %p272 = scmp.lt.s32.totalorder %s271, 1
        %s273 = scalar_select %p272, %s271, 1
        %s274 = scalar_lea.vmem %s3, %s273
        %s275 = sadd.s32 %s26, %s27
        %p276 = scmp.eq.s32.totalorder %s28, 0
        // Predicated region
        $region37: #{tpu_custom_call.1} parent=27 // pred_check
          %p277 = pneg %p276
        $region38: #{tpu_custom_call.1} parent=27 // pred_check_branch
          %279 = sbr.rel (%p277) target = $region40
        $region39: #{tpu_custom_call.1} parent=27 // pred_region
          %280 = vst [vmem:[#allocation2] sm:$0x3] 0.0
          %281 = vst [vmem:[#allocation3] sm:$0x3] 0.0
        $region40: #{tpu_custom_call.1} parent=27 // pred_fallthru
          _
        %v282 = vld [vmem:[%s224] sm:$0x3]
        %v283 = vld [vmem:[%s224 + $0x2] sm:$0x3]
        %v284 = vld [vmem:[%s224 + $0x4] sm:$0x3]
        %v285 = vld [vmem:[%s224 + $0x6] sm:$0x3]
        %v286 = vld [vmem:[%s233] sm:$0x3]
        %vm287 = vcmask 1041408
        %v288 = vsel %vm287, %v282, -inf
        %v289 = vsel %vm287, %v283, -inf
        %v290 = vsel %vm287, %v284, -inf
        %v291 = vsel %vm287, %v285, -inf
        %v292 = vmax.f32 %v288, %v289
        %v293 = vmax.f32 %v290, %v291
        %v294 = vmax.f32 %v292, %v293
        %v295 = vsub.f32 %v282, %v294
        %v296 = vsub.f32 %v283, %v294
        %v297 = vsub.f32 %v284, %v294
        %v298 = vsub.f32 %v285, %v294
        %v299 = vmul.f32 %v295, 1.442695
        %v300 = vpow.pop %v299
        %v301 = vmul.f32 %v296, 1.442695
        %v302 = vpow.pop %v301
        %v303 = vmul.f32 %v297, 1.442695
        %v304 = vpow.pop %v303
        %v305 = vmul.f32 %v298, 1.442695
        %v306 = vpow.pop %v305
        %v307 = vsel %vm287, %v300, 0.0
        %v308 = vsel %vm287, %v302, 0.0
        %v309 = vadd.f32 %v307, %v308
        %v310 = vsel %vm287, %v304, 0.0
        %v311 = vadd.f32 %v309, %v310
        %v312 = vsel %vm287, %v306, 0.0
        %v313 = vadd.f32 %v311, %v312
        %v314 = vlog2.pop %v313
        %v315 = vmul.f32 %v314, 0.6931472
        %v316 = vadd.f32 %v294, %v315
        %vm317 = vcmp.eq.s32.totalorder %v286, 0
        %vm318 = vcmp.eq.s32.totalorder %v286, 1
        %vm319 = vcmp.eq.s32.totalorder %v286, 2
        %vm320 = vcmp.eq.s32.totalorder %v286, 3
        %v321 = vsel %vm317, %v282, 0.0
        %v322 = vsel %vm318, %v283, 0.0
        %v323 = vsel %vm319, %v284, 0.0
        %v324 = vsel %vm320, %v285, 0.0
        %v325 = vsel %vm287, %v321, 0.0
        %v326 = vsel %vm287, %v322, 0.0
        %v327 = vadd.f32 %v325, %v326
        %v328 = vsel %vm287, %v323, 0.0
        %v329 = vadd.f32 %v327, %v328
        %v330 = vsel %vm287, %v324, 0.0
        %v331 = vadd.f32 %v329, %v330
        %vm332 = vcmp.ne.s32.totalorder %v286, 255
        %v333 = vld [vmem:[#allocation2] sm:$0x3]
        %v334 = vsub.f32 %v316, %v331
        %v335 = vsel %vm332, %v334, 0.0
        %v336 = vadd.f32 %v333, %v335
        %337 = vst [vmem:[#allocation2] sm:$0x3] %v336
        %v338 = vld [vmem:[#allocation3] sm:$0x3]
        %v339 = vsel %vm332, 1, 0
        %v340 = vcvt.s32.f32 %v339
        %v341 = vadd.f32 %v338, %v340
        %342 = vst [vmem:[#allocation3] sm:$0x3] %v341
        // Predicated region
        $region41: #{tpu_custom_call.1} parent=27 // pred_check
          %p343 = pneg %p276
        $region42: #{tpu_custom_call.1} parent=27 // pred_check_branch
          %345 = sbr.rel (%p343) target = $region44
        $region43: #{tpu_custom_call.1} parent=27 // pred_region
          %v346 = vld [vmem:[#allocation2] sm:$0x3]
          %v347 = vsel %vm287, %v346, 0.0
          %348 = vadd.xlane.f32.xlu0 %v347
          %v349 = vpop.xlane.xlu0 %348
          %v350 = vrot.slane %v349, 4
          %v351 = vadd.f32 %v349, %v350
          %v352 = vrot.slane %v351, 2
          %v353 = vadd.f32 %v351, %v352
          %v354 = vrot.slane %v353, 1
          %v355 = vadd.f32 %v353, %v354
          %s356 = vtos %v355
          %v357 = vstv %s356
          %vm358 = vcmask 0
          %359 = vst.msk [vmem:[%s269] sm:$0x1] %vm358, %v357
          %v360 = vld [vmem:[#allocation3] sm:$0x3]
          %v361 = vsel %vm287, %v360, 0.0
          %362 = vadd.xlane.f32.xlu0 %v361
          %v363 = vpop.xlane.xlu0 %362
          %v364 = vrot.slane %v363, 4
          %v365 = vadd.f32 %v363, %v364
          %v366 = vrot.slane %v365, 2
          %v367 = vadd.f32 %v365, %v366
          %v368 = vrot.slane %v367, 1
          %v369 = vadd.f32 %v367, %v368
          %s370 = vtos %v369
          %v371 = vstv %s370
          %372 = vst.msk [vmem:[%s274] sm:$0x1] %vm358, %v371
        $region44: #{tpu_custom_call.1} parent=27 // pred_fallthru
          _
        %s373 = sadd.s32 %s26, %s27
        %p374 = scmp.lt.s32.totalorder %s373, 1
        %s375 = scalar_select %p374, %s373, 1
        %s376 = scalar_lea.vmem %s2, %s375
        %s377 = sadd.s32 %s26, %s27
        %p378 = scmp.lt.s32.totalorder %s377, 1
        %s379 = scalar_select %p378, %s377, 1
        %s380 = scalar_lea.vmem %s3, %s379
        // Predicated region
        $region45: #{tpu_custom_call.1} parent=27 // pred_check
          %p381 = pneg %p120
        $region46: #{tpu_custom_call.1} parent=27 // pred_check_branch
          %383 = sbr.rel (%p381) target = $region48
        $region47: #{tpu_custom_call.1} parent=27 // pred_region
          %s384 = sadd.s32 %s26, %s27
        $region48: #{tpu_custom_call.1} parent=27 // pred_fallthru
          _
        // Predicated region
        $region49: #{tpu_custom_call.1} parent=27 // pred_check
          %p385 = pneg %p148
        $region50: #{tpu_custom_call.1} parent=27 // pred_check_branch
          %387 = sbr.rel (%p385) target = $region52
        $region51: #{tpu_custom_call.1} parent=27 // pred_region
          %s388 = sadd.s32 %s26, %s27
        $region52: #{tpu_custom_call.1} parent=27 // pred_fallthru
          _
      $region28: #{tpu_custom_call.1} parent=5 // pred_fallthru
        _
      %p389 = scmp.le.s32.totalorder 2, %s16
      // Predicated region
      $region53: #{tpu_custom_call.1} parent=5 // pred_check
        %p390 = pneg %p389
      $region54: #{tpu_custom_call.1} parent=5 // pred_check_branch
        %392 = sbr.rel (%p390) target = $region56
      $region55: #{tpu_custom_call.1} parent=5 // pred_region
        %s393 = ssub.s32 %s16, 2
        // Predicated region
        $region57: #{tpu_custom_call.1} parent=55 // pred_check
          %p394 = pneg %p126
        $region58: #{tpu_custom_call.1} parent=55 // pred_check_branch
          %396 = sbr.rel (%p394) target = $region60
        $region59: #{tpu_custom_call.1} parent=55 // pred_region
          %s397 = sadd.s32 %s29, %s30
          %p398 = scmp.lt.s32.totalorder %s397, 1
          %s399 = scalar_select %p398, %s397, 1
          %s400 = scalar_lea.vmem %s2, %s399
        $region60: #{tpu_custom_call.1} parent=55 // pred_fallthru
          _
        // Predicated region
        $region61: #{tpu_custom_call.1} parent=55 // pred_check
          %p401 = pneg %p154
        $region62: #{tpu_custom_call.1} parent=55 // pred_check_branch
          %403 = sbr.rel (%p401) target = $region64
        $region63: #{tpu_custom_call.1} parent=55 // pred_region
          %s404 = sadd.s32 %s29, %s30
          %p405 = scmp.lt.s32.totalorder %s404, 1
          %s406 = scalar_select %p405, %s404, 1
          %s407 = scalar_lea.vmem %s3, %s406
        $region64: #{tpu_custom_call.1} parent=55 // pred_fallthru
          _
      $region56: #{tpu_custom_call.1} parent=5 // pred_fallthru
        _
    $region6: #{tpu_custom_call.1} parent=1 // loop_footer
      %s20 = sadd.s32 1, %s16
    $region7: #{tpu_custom_call.1} parent=1 // loop_footer_branch
      %15 = sbr.rel target = $region3
    $region8: #{tpu_custom_call.1} parent=1 // loop_exit
      _
    %408 = vsyncpa [#allocation5], 1
    %s409 = scalar_lea.sflag [#allocation5], 1
    %410 = vsyncpa %s409, 1
    %411 = vsyncpa [#allocation7], 1
    %s412 = scalar_lea.sflag [#allocation7], 1
    %413 = vsyncpa %s412, 1

</llo_original>
